<compile_context>
chip_gen: v6e
topology: v6e:2x2x1
jax: 0.10.0
libtpu: 0.0.40
codegen_flags: <defaults>
</compile_context>

<pallas_src>
import functools

import jax
import jax.numpy as jnp
from jax import lax
from jax.experimental import pallas as pl
from jax.experimental.pallas import tpu as pltpu


# ---------------------------------------------------------------------------
# Compiler params shared by both kernels: single row/ent grid axis, parallel
# (megacore-shardable), explicit VMEM budget safe on v5e/v6e/v7x.
# ---------------------------------------------------------------------------
_COMPILER_PARAMS = pltpu.CompilerParams(
    dimension_semantics=("parallel",),
    vmem_limit_bytes=32 * 1024 * 1024,
)

_ROW_TILE = 512    # row tile for the BAGCN transform (multiple of 16 for bf16)
_ENT_TILE = 1024   # entity tile for DistMult scoring (multiple of 128, lane-dense)


def _tile(n, target):
    """Full extent when small, otherwise the fixed (hardware-aligned) target."""
    return n if n <= target else target


# ---------------------------------------------------------------------------
# Kernel 1: fused multi-head BAGCN + output BAGCN layer for one row tile.
#   cat = tanh(x @ [W_0|...|W_{H-1}] + [b_0|...|b_{H-1}]) + [x|x|...|x]
#   out = tanh(cat @ W_out + b_out) + cat @ Wres_out
# The intermediate `cat` (= e_cat / r_cat) stays in VMEM — no HBM round-trip.
# ---------------------------------------------------------------------------
def fused_bagcn_kernel(x_ref, w_heads_ref, b_heads_ref,
                       w_out_ref, b_out_ref, wres_out_ref, o_ref,
                       *, num_heads):
    x = x_ref[...]                                        # (TM, D) bf16
    # multi-head transform, all heads fused along the MXU N dim
    y = jnp.tanh(
        jnp.dot(x, w_heads_ref[...], preferred_element_type=jnp.float32)
        + b_heads_ref[...]
    )
    # identity residual per head (embed_dim == gcn_dim): lane concat of x,
    # no x @ eye matmul on the MXU and no identity-weight DMA.
    res = jnp.concatenate([x] * num_heads, axis=-1).astype(jnp.float32)
    cat = (y + res).astype(x.dtype)                       # (TM, H*G) bf16

    # output BAGCN layer (real projection residual, dims differ)
    y2 = jnp.tanh(
        jnp.dot(cat, w_out_ref[...], preferred_element_type=jnp.float32)
        + b_out_ref[...]
    )
    res2 = jnp.dot(cat, wres_out_ref[...], preferred_element_type=jnp.float32)
    o_ref[...] = (y2 + res2).astype(o_ref.dtype)          # (TM, G)


def fused_bagcn(x, w_heads, b_heads, w_out, b_out, wres_out,
                *, num_heads, row_tile=_ROW_TILE):
    rows, d = x.shape
    hg = w_heads.shape[1]
    g = w_out.shape[1]
    tm = _tile(rows, row_tile)
    kernel = functools.partial(fused_bagcn_kernel, num_heads=num_heads)
    return pl.pallas_call(
        kernel,
        out_shape=jax.ShapeDtypeStruct((rows, g), x.dtype),
        grid=(pl.cdiv(rows, tm),),
        in_specs=[
            pl.BlockSpec((tm, d), lambda i: (i, 0)),      # row tile of the table
            pl.BlockSpec((d, hg), lambda i: (0, 0)),      # fused head weights
            pl.BlockSpec((1, hg), lambda i: (0, 0)),      # fused head biases
            pl.BlockSpec((hg, g), lambda i: (0, 0)),      # out-layer weight
            pl.BlockSpec((1, g), lambda i: (0, 0)),       # out-layer bias
            pl.BlockSpec((hg, g), lambda i: (0, 0)),      # out-layer residual proj
        ],
        out_specs=pl.BlockSpec((tm, g), lambda i: (i, 0)),
        compiler_params=_COMPILER_PARAMS,
    )(x, w_heads, b_heads, w_out, b_out, wres_out)


# ---------------------------------------------------------------------------
# Kernel 2: DistMult scoring, tiled over num_ent (the only large dim).
#   scores[:, j*TN:(j+1)*TN] = sigmoid((sub*rel) @ ent_tile.T)
# ---------------------------------------------------------------------------
def distmult_kernel(sub_ref, rel_ref, ent_ref, o_ref):
    # obj is recomputed per ent tile: [batch, G] VPU work that rides for free
    # under the MXU matmul.  Avoiding cross-iteration scratch state keeps the
    # grid axis safe to shard across TensorCores ("parallel").
    obj = sub_ref[...] * rel_ref[...]
    # transposed contraction: contract the feature dim of both operands
    # directly on the MXU — no explicit .T / XLU transpose of the ent tile.
    scores = lax.dot_general(
        obj, ent_ref[...],
        dimension_numbers=(((1,), (1,)), ((), ())),
        preferred_element_type=jnp.float32,
    )
    o_ref[...] = jax.nn.sigmoid(scores).astype(o_ref.dtype)


def distmult_score(sub_emb, rel_emb, ent_out, *, ent_tile=_ENT_TILE):
    batch, g = sub_emb.shape
    n_ent = ent_out.shape[0]
    tn = _tile(n_ent, ent_tile)
    return pl.pallas_call(
        distmult_kernel,
        out_shape=jax.ShapeDtypeStruct((batch, n_ent), jnp.float32),
        grid=(pl.cdiv(n_ent, tn),),
        in_specs=[
            pl.BlockSpec((batch, g), lambda j: (0, 0)),   # resident across grid
            pl.BlockSpec((batch, g), lambda j: (0, 0)),   # resident across grid
            pl.BlockSpec((tn, g), lambda j: (j, 0)),      # pipelined ent tiles
        ],
        out_specs=pl.BlockSpec((batch, tn), lambda j: (0, j)),  # lane-dense slab
        compiler_params=_COMPILER_PARAMS,
    )(sub_emb, rel_emb, ent_out)


# ---------------------------------------------------------------------------
# Parameters (deterministic init) and forward pass
# ---------------------------------------------------------------------------
def init_params(key, num_ent, num_rel, embed_dim, gcn_dim, num_heads,
                dtype=jnp.bfloat16):
    # identity residual of the per-head BAGCN layers requires matching dims
    assert embed_dim == gcn_dim, "per-head identity residual needs embed_dim == gcn_dim"
    ks = iter(jax.random.split(key, 16))
    xav = lambda k, shp: (jax.random.normal(k, shp, jnp.float32)
                          * (2.0 / (shp[0] + shp[-1])) ** 0.5)
    bias = lambda k, shp: (0.1 * jax.random.normal(k, shp, jnp.float32))
    hg = gcn_dim * num_heads
    return {
        "num_heads": num_heads,
        "ent_embed": xav(next(ks), (num_ent, embed_dim)).astype(dtype),
        "rel_embed": xav(next(ks), (num_rel * 2, embed_dim)).astype(dtype),
        # per-head weights fused along the output dim: [W_0 | ... | W_{H-1}]
        "w_heads_e": xav(next(ks), (embed_dim, hg)).astype(dtype),
        "b_heads_e": bias(next(ks), (1, hg)),
        "w_heads_r": xav(next(ks), (embed_dim, hg)).astype(dtype),
        "b_heads_r": bias(next(ks), (1, hg)),
        # output BAGCN layer (dims differ -> real projection residual)
        "w_out_e": xav(next(ks), (hg, gcn_dim)).astype(dtype),
        "b_out_e": bias(next(ks), (1, gcn_dim)),
        "wres_out_e": xav(next(ks), (hg, gcn_dim)).astype(dtype),
        "w_out_r": xav(next(ks), (hg, gcn_dim)).astype(dtype),
        "b_out_r": bias(next(ks), (1, gcn_dim)),
        "wres_out_r": xav(next(ks), (hg, gcn_dim)).astype(dtype),
    }


def bagcn_distmult_forward(params, sub, rel):
    h = params["num_heads"]
    # entity / relation tables: one fused kernel each (heads + out layer)
    e_out = fused_bagcn(params["ent_embed"], params["w_heads_e"], params["b_heads_e"],
                        params["w_out_e"], params["b_out_e"], params["wres_out_e"],
                        num_heads=h)
    r_out = fused_bagcn(params["rel_embed"], params["w_heads_r"], params["b_heads_r"],
                        params["w_out_r"], params["b_out_r"], params["wres_out_r"],
                        num_heads=h)
    # index_select: tiny gather, kept as plain-JAX glue.
    # TODO(synk): could be fused into the scoring kernel with
    #             PrefetchScalarGridSpec + pl.Element row gathers.
    sub_emb = jnp.take(e_out, sub, axis=0)
    rel_emb = jnp.take(r_out, rel, axis=0)
    # DistMult scoring + sigmoid (hot path), tiled over num_ent.
    return distmult_score(sub_emb, rel_emb, e_out)


# Pure-JAX reference with identical dtypes/ops for a sanity check.
def reference_forward(params, sub, rel):
    h = params["num_heads"]

    def table(x, w_h, b_h, w_o, b_o, wres_o):
        y = jnp.tanh(jnp.dot(x, w_h, preferred_element_type=jnp.float32) + b_h)
        res = jnp.concatenate([x] * h, axis=-1).astype(jnp.float32)
        cat = (y + res).astype(x.dtype)
        y2 = jnp.tanh(jnp.dot(cat, w_o, preferred_element_type=jnp.float32) + b_o)
        out = y2 + jnp.dot(cat, wres_o, preferred_element_type=jnp.float32)
        return out.astype(x.dtype)

    e_out = table(params["ent_embed"], params["w_heads_e"], params["b_heads_e"],
                  params["w_out_e"], params["b_out_e"], params["wres_out_e"])
    r_out = table(params["rel_embed"], params["w_heads_r"], params["b_heads_r"],
                  params["w_out_r"], params["b_out_r"], params["wres_out_r"])
    sub_emb = jnp.take(e_out, sub, axis=0)
    rel_emb = jnp.take(r_out, rel, axis=0)
    obj = sub_emb * rel_emb
    scores = jnp.dot(obj, e_out.T, preferred_element_type=jnp.float32)
    return jax.nn.sigmoid(scores)


if __name__ == "__main__":
    # Small, module-consistent shapes.
    num_ent, num_rel = 32, 4
    embed_dim, gcn_dim, num_heads = 32, 32, 2
    batch = 8

    key = jax.random.PRNGKey(0)
    k_param, k_sub, k_rel = jax.random.split(key, 3)
    params = init_params(k_param, num_ent, num_rel, embed_dim, gcn_dim, num_heads)

    sub = jax.random.randint(k_sub, (batch,), 0, num_ent, dtype=jnp.int32)
    rel = jax.random.randint(k_rel, (batch,), 0, num_rel * 2, dtype=jnp.int32)

    out = jax.block_until_ready(bagcn_distmult_forward(params, sub, rel))
    ref = reference_forward(params, sub, rel)

    assert out.shape == (batch, num_ent)
    assert out.dtype == jnp.float32
    max_err = float(jnp.max(jnp.abs(out - ref)))
    assert jnp.allclose(out, ref, atol=2e-2, rtol=2e-2), f"max_err={max_err}"

    print("KERNEL_OK")
</pallas_src>

<mosaic_0001>
module attributes {stable_mosaic.version = 11 : i64} {
  func.func @fused_bagcn_kernel(%arg0: i32, %arg1: memref<32x32xbf16, #tpu.memory_space<vmem>>, %arg2: memref<32x64xbf16, #tpu.memory_space<vmem>>, %arg3: memref<1x64xf32, #tpu.memory_space<vmem>>, %arg4: memref<64x32xbf16, #tpu.memory_space<vmem>>, %arg5: memref<1x32xf32, #tpu.memory_space<vmem>>, %arg6: memref<64x32xbf16, #tpu.memory_space<vmem>>, %arg7: memref<32x32xbf16, #tpu.memory_space<vmem>>) attributes {dimension_semantics = [#tpu.dimension_semantics<parallel>], iteration_bounds = array<i64: 1>, scalar_prefetch = 0 : i64, scratch_operands = 0 : i64, tpu.core_type = #tpu.core_type<tc>, window_params = [{transform_indices = @transform_0, window_bounds = array<i64: 32, 32>}, {pipeline_mode = #tpu.pipeline_mode<synchronous>, transform_indices = @transform_1, window_bounds = array<i64: 32, 64>}, {pipeline_mode = #tpu.pipeline_mode<synchronous>, transform_indices = @transform_2, window_bounds = array<i64: 1, 64>}, {pipeline_mode = #tpu.pipeline_mode<synchronous>, transform_indices = @transform_3, window_bounds = array<i64: 64, 32>}, {pipeline_mode = #tpu.pipeline_mode<synchronous>, transform_indices = @transform_4, window_bounds = array<i64: 1, 32>}, {pipeline_mode = #tpu.pipeline_mode<synchronous>, transform_indices = @transform_5, window_bounds = array<i64: 64, 32>}, {transform_indices = @transform_6, window_bounds = array<i64: 32, 32>}]} {
    %c0 = arith.constant 0 : index
    %c0_0 = arith.constant 0 : index
    %0 = vector.load %arg1[%c0, %c0_0] : memref<32x32xbf16, #tpu.memory_space<vmem>>, vector<32x32xbf16>
    %c0_1 = arith.constant 0 : index
    %c0_2 = arith.constant 0 : index
    %1 = vector.load %arg2[%c0_1, %c0_2] : memref<32x64xbf16, #tpu.memory_space<vmem>>, vector<32x64xbf16>
    %cst = arith.constant dense<0.000000e+00> : vector<32x64xf32>
    %2 = tpu.matmul %0, %1, %cst {dimension_numbers = #tpu.dot_dimension_numbers<[1], [0], [0], [1], [0, 0, 1, 1], [], []>} : vector<32x32xbf16>, vector<32x64xbf16>, vector<32x64xf32> -> vector<32x64xf32>
    %c0_3 = arith.constant 0 : index
    %c0_4 = arith.constant 0 : index
    %3 = vector.load %arg3[%c0_3, %c0_4] : memref<1x64xf32, #tpu.memory_space<vmem>>, vector<1x64xf32>
    %4 = vector.broadcast %3 : vector<1x64xf32> to vector<32x64xf32>
    %5 = arith.addf %2, %4 : vector<32x64xf32>
    %6 = math.tanh %5 : vector<32x64xf32>
    %7 = tpu.concatenate %0, %0 in 1 : vector<32x32xbf16>, vector<32x32xbf16> -> vector<32x64xbf16>
    %8 = arith.extf %7 : vector<32x64xbf16> to vector<32x64xf32>
    %9 = arith.addf %6, %8 : vector<32x64xf32>
    %10 = arith.truncf %9 : vector<32x64xf32> to vector<32x64xbf16>
    %c0_5 = arith.constant 0 : index
    %c0_6 = arith.constant 0 : index
    %11 = vector.load %arg4[%c0_5, %c0_6] : memref<64x32xbf16, #tpu.memory_space<vmem>>, vector<64x32xbf16>
    %cst_7 = arith.constant dense<0.000000e+00> : vector<32x32xf32>
    %12 = tpu.matmul %10, %11, %cst_7 {dimension_numbers = #tpu.dot_dimension_numbers<[1], [0], [0], [1], [0, 0, 1, 1], [], []>} : vector<32x64xbf16>, vector<64x32xbf16>, vector<32x32xf32> -> vector<32x32xf32>
    %c0_8 = arith.constant 0 : index
    %c0_9 = arith.constant 0 : index
    %13 = vector.load %arg5[%c0_8, %c0_9] : memref<1x32xf32, #tpu.memory_space<vmem>>, vector<1x32xf32>
    %14 = vector.broadcast %13 : vector<1x32xf32> to vector<32x32xf32>
    %15 = arith.addf %12, %14 : vector<32x32xf32>
    %16 = math.tanh %15 : vector<32x32xf32>
    %c0_10 = arith.constant 0 : index
    %c0_11 = arith.constant 0 : index
    %17 = vector.load %arg6[%c0_10, %c0_11] : memref<64x32xbf16, #tpu.memory_space<vmem>>, vector<64x32xbf16>
    %cst_12 = arith.constant dense<0.000000e+00> : vector<32x32xf32>
    %18 = tpu.matmul %10, %17, %cst_12 {dimension_numbers = #tpu.dot_dimension_numbers<[1], [0], [0], [1], [0, 0, 1, 1], [], []>} : vector<32x64xbf16>, vector<64x32xbf16>, vector<32x32xf32> -> vector<32x32xf32>
    %19 = arith.addf %16, %18 : vector<32x32xf32>
    %20 = arith.truncf %19 : vector<32x32xf32> to vector<32x32xbf16>
    %c0_13 = arith.constant 0 : index
    %c0_14 = arith.constant 0 : index
    %21 = vector.load %arg7[%c0_13, %c0_14] : memref<32x32xbf16, #tpu.memory_space<vmem>>, vector<32x32xbf16>
    tpu.vector_store %arg7[%c0_13, %c0_14], %20 {strides = array<i32>} : memref<32x32xbf16, #tpu.memory_space<vmem>>, vector<32x32xbf16>,
    return
  }
  func.func @transform_0(%arg0: i32) -> (i32, i32) {
    %c0_i32 = arith.constant 0 : i32
    %c0_i32_0 = arith.constant 0 : i32
    return %arg0, %c0_i32 : i32, i32
  }
  func.func @transform_1(%arg0: i32) -> (i32, i32) {
    %c0_i32 = arith.constant 0 : i32
    %c0_i32_0 = arith.constant 0 : i32
    %c0_i32_1 = arith.constant 0 : i32
    return %c0_i32, %c0_i32_0 : i32, i32
  }
  func.func @transform_2(%arg0: i32) -> (i32, i32) {
    %c0_i32 = arith.constant 0 : i32
    %c0_i32_0 = arith.constant 0 : i32
    %c0_i32_1 = arith.constant 0 : i32
    return %c0_i32, %c0_i32_0 : i32, i32
  }
  func.func @transform_3(%arg0: i32) -> (i32, i32) {
    %c0_i32 = arith.constant 0 : i32
    %c0_i32_0 = arith.constant 0 : i32
    %c0_i32_1 = arith.constant 0 : i32
    return %c0_i32, %c0_i32_0 : i32, i32
  }
  func.func @transform_4(%arg0: i32) -> (i32, i32) {
    %c0_i32 = arith.constant 0 : i32
    %c0_i32_0 = arith.constant 0 : i32
    %c0_i32_1 = arith.constant 0 : i32
    return %c0_i32, %c0_i32_0 : i32, i32
  }
  func.func @transform_5(%arg0: i32) -> (i32, i32) {
    %c0_i32 = arith.constant 0 : i32
    %c0_i32_0 = arith.constant 0 : i32
    %c0_i32_1 = arith.constant 0 : i32
    return %c0_i32, %c0_i32_0 : i32, i32
  }
  func.func @transform_6(%arg0: i32) -> (i32, i32) {
    %c0_i32 = arith.constant 0 : i32
    %c0_i32_0 = arith.constant 0 : i32
    return %arg0, %c0_i32 : i32, i32
  }
}

</mosaic_0001>

<llo_original>
// kernel: tpu_custom_call.1
$region0: #{tpu_custom_call.1}
  #allocation0 [shape = 'u32[]', space=smem, size = 0x4, offset = 0x4, fixed_abs, tag = 'smem constant byte address 0x4 - core index']
  #allocation1 [shape = 'u32[144,128]{1,0:T(1,128)}', space=vmem, size = 0x12000, scoped, tag = 'internal scratch']
  %s0 = inlined_call_operand.vmem [shape: bf16[32,32], index: 0, kind: input, shape index: {}]
  %s1 = inlined_call_operand.vmem [shape: bf16[32,64], index: 1, kind: input, shape index: {}]
  %s2 = inlined_call_operand.vmem [shape: f32[1,64], index: 2, kind: input, shape index: {}]
  %s3 = inlined_call_operand.vmem [shape: bf16[64,32], index: 3, kind: input, shape index: {}]
  %s4 = inlined_call_operand.vmem [shape: f32[1,32], index: 4, kind: input, shape index: {}]
  %s5 = inlined_call_operand.vmem [shape: bf16[64,32], index: 5, kind: input, shape index: {}]
  %s6 = inlined_call_operand.hbm [shape: bf16[32,32], index: 6, kind: output, shape index: {}]
  %s7 = sld [smem:[#allocation0]]
  $region34: #{tpu_custom_call.1} parent=0
    _
  %s9 = ssub.s32 1, %s7
  %s10 = scalar_select 0, %s9, %s7
  $region1: #{tpu_custom_call.1} parent=0
    #allocation2 [shape = 'u8[8192]{0}', space=vmem, size = 0x2000, scoped, tag = 'output window, operand 0, single buffered']
    #allocation3 [shape = 's32[1]{0}', space=sflag, size = 0x4, scoped, tag = 'scoped memory for tpu_custom_call.1']
    %11 = vsyncpa [#allocation3], 0
    // Predicated region
    $region2: #{tpu_custom_call.1} parent=1 // pred_check
      _
    $region3: #{tpu_custom_call.1} parent=1 // pred_check_branch
      %13 = sbr.rel (0) target = $region5
    $region4: #{tpu_custom_call.1} parent=1 // pred_region
      _
    $region5: #{tpu_custom_call.1} parent=1 // pred_fallthru
      _
    // Predicated region
    $region6: #{tpu_custom_call.1} parent=1 // pred_check
      _
    $region7: #{tpu_custom_call.1} parent=1 // pred_check_branch
      %15 = sbr.rel (0) target = $region9
    $region8: #{tpu_custom_call.1} parent=1 // pred_region
      _
    $region9: #{tpu_custom_call.1} parent=1 // pred_fallthru
      _
    // Predicated region
    $region10: #{tpu_custom_call.1} parent=1 // pred_check
      _
    $region11: #{tpu_custom_call.1} parent=1 // pred_check_branch
      %17 = sbr.rel (0) target = $region13
    $region12: #{tpu_custom_call.1} parent=1 // pred_region
      _
    $region13: #{tpu_custom_call.1} parent=1 // pred_fallthru
      _
    // Predicated region
    $region14: #{tpu_custom_call.1} parent=1 // pred_check
      _
    $region15: #{tpu_custom_call.1} parent=1 // pred_check_branch
      %19 = sbr.rel (0) target = $region17
    $region16: #{tpu_custom_call.1} parent=1 // pred_region
      _
    $region17: #{tpu_custom_call.1} parent=1 // pred_fallthru
      _
    // Predicated region
    $region18: #{tpu_custom_call.1} parent=1 // pred_check
      _
    $region19: #{tpu_custom_call.1} parent=1 // pred_check_branch
      %21 = sbr.rel (0) target = $region21
    $region20: #{tpu_custom_call.1} parent=1 // pred_region
      _
    $region21: #{tpu_custom_call.1} parent=1 // pred_fallthru
      _
    // Predicated region
    $region22: #{tpu_custom_call.1} parent=1 // pred_check
      _
    $region23: #{tpu_custom_call.1} parent=1 // pred_check_branch
      %23 = sbr.rel (0) target = $region25
    $region24: #{tpu_custom_call.1} parent=1 // pred_region
      _
    $region25: #{tpu_custom_call.1} parent=1 // pred_fallthru
      _
    %v25 = vld [vmem:[%s0] sm:$0xf]
    %v26 = vld [vmem:[%s0 + $0x4] sm:$0xf]
    %v27 = vld [vmem:[%s0 + $0x8] sm:$0xf]
    %v28 = vld [vmem:[%s0 + $0xc] sm:$0xf]
    %v29 = vld [vmem:[%s1] sm:$0xf]
    %v30 = vld [vmem:[%s1 + $0x4] sm:$0xf]
    %v31 = vld [vmem:[%s1 + $0x8] sm:$0xf]
    %v32 = vld [vmem:[%s1 + $0xc] sm:$0xf]
    %v33 = vld [vmem:[%s2] sm:$0x1]
    %v35 = vlaneseq
    %v36 = vshrl.u32 %v35, 7
    %v37 = vsub.s32 0, %v36
    %v38 = vrot.slane %v33, %v37
    %v44 = vunpack.c.l.b16 %v25
    %v45 = vunpack.c.l.b16 %v26
    %v46 = vunpack.c.l.b16 %v27
    %v47 = vunpack.c.l.b16 %v28
    %v48 = vpack.c.b16 %v45, %v44
    %v49 = vpack.c.b16 %v47, %v46
    %v54 = vunpack.c.l.b16 %v29
    %v55 = vunpack.c.l.b16 %v30
    %v56 = vunpack.c.l.b16 %v31
    %v57 = vunpack.c.l.b16 %v32
    %v58 = vpack.c.b16 %v55, %v54
    %v59 = vpack.c.b16 %v57, %v56
    %vm62 = vcmask 261120
    %v64 = vsel %vm62, %v48, 0
    %v67 = vsel %vm62, %v49, 0
    %69 = vmatprep.subr.bf16.mxu0 0
    %70 = vmatpush1.bf16.msra.mxu0 0
    %71 = vmatprep.subr.bf16.mxu0 0
    %72 = vmatpush1.bf16.msra.mxu0 0
    %73 = vmatprep.subr.bf16.mxu0 0
    %74 = vmatpush1.bf16.msra.mxu0 0
    %75 = vmatprep.subr.bf16.mxu0 0
    %76 = vmatpush1.bf16.msra.mxu0 0
    %77 = vmatprep.subr.bf16.mxu0 0
    %78 = vmatpush1.bf16.msra.mxu0 0
    %79 = vmatprep.subr.bf16.mxu0 0
    %80 = vmatpush1.bf16.msra.mxu0 0
    %81 = vmatprep.subr.bf16.mxu0 0
    %82 = vmatpush1.bf16.msra.mxu0 %v59
    %83 = vmatprep.subr.bf16.mxu0 0
    %84 = vmatpush1.bf16.msra.mxu0 %v58
    %85 = vmatprep.subr.bf16.mxu0 0
    %86 = vmatpush2.bf16.msra.mxu0 0
    %87 = vmatprep.subr.bf16.mxu0 0
    %88 = vmatpush2.bf16.msra.mxu0 0
    %89 = vmatprep.subr.bf16.mxu0 0
    %90 = vmatpush2.bf16.msra.mxu0 0
    %91 = vmatprep.subr.bf16.mxu0 0
    %92 = vmatpush2.bf16.msra.mxu0 0
    %93 = vmatprep.subr.bf16.mxu0 0
    %94 = vmatpush2.bf16.msra.mxu0 0
    %95 = vmatprep.subr.bf16.mxu0 0
    %96 = vmatpush2.bf16.msra.mxu0 0
    %97 = vmatprep.subr.bf16.mxu0 0
    %98 = vmatpush2.bf16.msra.mxu0 0
    %99 = vmatprep.subr.bf16.mxu0 0
    %100 = vmatpush2.bf16.msra.mxu0 0
    %101 = vmatprep.mubr.bf16.mxu0 0
    %102 = vmatmul.mubr.bf16.gmra.mxu0 %v64
    %v103 = vpop.f32.mrf.mxu0
    %v104 = vadd.f32 %v38, %v103
    %v105 = vpop.f32.mrf.mxu0
    %v106 = vpop.f32.mrf.mxu0
    %v107 = vadd.f32 %v38, %v106
    %v108 = vpop.f32.mrf.mxu0
    %109 = vmatprep.mubr.bf16.mxu0 0
    %110 = vmatmul.mubr.bf16.gmra.mxu0 %v67
    %v111 = vpop.f32.mrf.mxu0
    %v112 = vadd.f32 %v38, %v111
    %v113 = vpop.f32.mrf.mxu0
    %v114 = vpop.f32.mrf.mxu0
    %v115 = vadd.f32 %v38, %v114
    %v116 = vpop.f32.mrf.mxu0
    %117 = vdwg.mxu0
    %v118 = vtanh.pop %v104
    %v119 = vtanh.pop %v107
    %v120 = vtanh.pop %v112
    %v121 = vtanh.pop %v115
    %122 = vrot.lane.b32.xlu0 %v48, 32
    %v123 = vpop.permute.xlu0 %122
    %124 = vrot.lane.b32.xlu0 %v49, 32
    %v125 = vpop.permute.xlu0 %124
    %v127 = vsel %vm62, %v48, %v123
    %v130 = vsel %vm62, %v49, %v125
    %v132 = vunpack.c.l.bf16 %v127
    %v133 = vunpack.c.h.bf16 %v127
    %v134 = vunpack.c.l.bf16 %v130
    %v135 = vunpack.c.h.bf16 %v130
    %v136 = vadd.f32 %v118, %v132
    %v137 = vadd.f32 %v119, %v133
    %v138 = vadd.f32 %v120, %v134
    %v139 = vadd.f32 %v121, %v135
    %v140 = vpack.c.bf16 %v137, %v136
    %v141 = vpack.c.bf16 %v139, %v138
    %v142 = vld [vmem:[%s3] sm:$0xf]
    %v143 = vld [vmem:[%s3 + $0x4] sm:$0xf]
    %v144 = vld [vmem:[%s3 + $0x8] sm:$0xf]
    %v145 = vld [vmem:[%s3 + $0xc] sm:$0xf]
    %v146 = vld [vmem:[%s3 + $0x10] sm:$0xf]
    %v147 = vld [vmem:[%s3 + $0x14] sm:$0xf]
    %v148 = vld [vmem:[%s3 + $0x18] sm:$0xf]
    %v149 = vld [vmem:[%s3 + $0x1c] sm:$0xf]
    %v150 = vld [vmem:[%s4] sm:$0x1]
    %v152 = vlaneseq
    %v153 = vshrl.u32 %v152, 7
    %v154 = vsub.s32 0, %v153
    %v155 = vrot.slane %v150, %v154
    %v165 = vunpack.c.l.b16 %v142
    %v166 = vunpack.c.l.b16 %v143
    %v167 = vunpack.c.l.b16 %v144
    %v168 = vunpack.c.l.b16 %v145
    %v169 = vunpack.c.l.b16 %v146
    %v170 = vunpack.c.l.b16 %v147
    %v171 = vunpack.c.l.b16 %v148
    %v172 = vunpack.c.l.b16 %v149
    %v173 = vpack.c.b16 %v166, %v165
    %v174 = vpack.c.b16 %v168, %v167
    %v175 = vpack.c.b16 %v170, %v169
    %v176 = vpack.c.b16 %v172, %v171
    %vm181 = vcmask 523264
    %v183 = vsel %vm181, %v140, 0
    %v186 = vsel %vm181, %v141, 0
    %188 = vmatprep.subr.bf16.mxu0 0
    %189 = vmatpush1.bf16.msra.mxu0 0
    %190 = vmatprep.subr.bf16.mxu0 0
    %191 = vmatpush1.bf16.msra.mxu0 0
    %192 = vmatprep.subr.bf16.mxu0 0
    %193 = vmatpush1.bf16.msra.mxu0 0
    %194 = vmatprep.subr.bf16.mxu0 0
    %195 = vmatpush1.bf16.msra.mxu0 0
    %196 = vmatprep.subr.bf16.mxu0 0
    %197 = vmatpush1.bf16.msra.mxu0 %v176
    %198 = vmatprep.subr.bf16.mxu0 0
    %199 = vmatpush1.bf16.msra.mxu0 %v175
    %200 = vmatprep.subr.bf16.mxu0 0
    %201 = vmatpush1.bf16.msra.mxu0 %v174
    %202 = vmatprep.subr.bf16.mxu0 0
    %203 = vmatpush1.bf16.msra.mxu0 %v173
    %204 = vmatprep.subr.bf16.mxu0 0
    %205 = vmatpush2.bf16.msra.mxu0 0
    %206 = vmatprep.subr.bf16.mxu0 0
    %207 = vmatpush2.bf16.msra.mxu0 0
    %208 = vmatprep.subr.bf16.mxu0 0
    %209 = vmatpush2.bf16.msra.mxu0 0
    %210 = vmatprep.subr.bf16.mxu0 0
    %211 = vmatpush2.bf16.msra.mxu0 0
    %212 = vmatprep.subr.bf16.mxu0 0
    %213 = vmatpush2.bf16.msra.mxu0 0
    %214 = vmatprep.subr.bf16.mxu0 0
    %215 = vmatpush2.bf16.msra.mxu0 0
    %216 = vmatprep.subr.bf16.mxu0 0
    %217 = vmatpush2.bf16.msra.mxu0 0
    %218 = vmatprep.subr.bf16.mxu0 0
    %219 = vmatpush2.bf16.msra.mxu0 0
    %220 = vmatprep.mubr.bf16.mxu0 0
    %221 = vmatmul.mubr.bf16.gmra.mxu0 %v183
    %v222 = vpop.f32.mrf.mxu0
    %v223 = vadd.f32 %v155, %v222
    %v224 = vpop.f32.mrf.mxu0
    %v225 = vpop.f32.mrf.mxu0
    %v226 = vadd.f32 %v155, %v225
    %v227 = vpop.f32.mrf.mxu0
    %228 = vmatprep.mubr.bf16.mxu0 0
    %229 = vmatmul.mubr.bf16.gmra.mxu0 %v186
    %v230 = vpop.f32.mrf.mxu0
    %v231 = vadd.f32 %v155, %v230
    %v232 = vpop.f32.mrf.mxu0
    %v233 = vpop.f32.mrf.mxu0
    %v234 = vadd.f32 %v155, %v233
    %v235 = vpop.f32.mrf.mxu0
    %236 = vdwg.mxu0
    %v237 = vtanh.pop %v223
    %v238 = vtanh.pop %v226
    %v239 = vtanh.pop %v231
    %v240 = vtanh.pop %v234
    %v241 = vld [vmem:[%s5] sm:$0xf]
    %v242 = vld [vmem:[%s5 + $0x4] sm:$0xf]
    %v243 = vld [vmem:[%s5 + $0x8] sm:$0xf]
    %v244 = vld [vmem:[%s5 + $0xc] sm:$0xf]
    %v245 = vld [vmem:[%s5 + $0x10] sm:$0xf]
    %v246 = vld [vmem:[%s5 + $0x14] sm:$0xf]
    %v247 = vld [vmem:[%s5 + $0x18] sm:$0xf]
    %v248 = vld [vmem:[%s5 + $0x1c] sm:$0xf]
    %v257 = vunpack.c.l.b16 %v241
    %v258 = vunpack.c.l.b16 %v242
    %v259 = vunpack.c.l.b16 %v243
    %v260 = vunpack.c.l.b16 %v244
    %v261 = vunpack.c.l.b16 %v245
    %v262 = vunpack.c.l.b16 %v246
    %v263 = vunpack.c.l.b16 %v247
    %v264 = vunpack.c.l.b16 %v248
    %v265 = vpack.c.b16 %v258, %v257
    %v266 = vpack.c.b16 %v260, %v259
    %v267 = vpack.c.b16 %v262, %v261
    %v268 = vpack.c.b16 %v264, %v263
    %273 = vmatprep.subr.bf16.mxu0 0
    %274 = vmatpush1.bf16.msra.mxu0 0
    %275 = vmatprep.subr.bf16.mxu0 0
    %276 = vmatpush1.bf16.msra.mxu0 0
    %277 = vmatprep.subr.bf16.mxu0 0
    %278 = vmatpush1.bf16.msra.mxu0 0
    %279 = vmatprep.subr.bf16.mxu0 0
    %280 = vmatpush1.bf16.msra.mxu0 0
    %281 = vmatprep.subr.bf16.mxu0 0
    %282 = vmatpush1.bf16.msra.mxu0 %v268
    %283 = vmatprep.subr.bf16.mxu0 0
    %284 = vmatpush1.bf16.msra.mxu0 %v267
    %285 = vmatprep.subr.bf16.mxu0 0
    %286 = vmatpush1.bf16.msra.mxu0 %v266
    %287 = vmatprep.subr.bf16.mxu0 0
    %288 = vmatpush1.bf16.msra.mxu0 %v265
    %289 = vmatprep.subr.bf16.mxu0 0
    %290 = vmatpush2.bf16.msra.mxu0 0
    %291 = vmatprep.subr.bf16.mxu0 0
    %292 = vmatpush2.bf16.msra.mxu0 0
    %293 = vmatprep.subr.bf16.mxu0 0
    %294 = vmatpush2.bf16.msra.mxu0 0
    %295 = vmatprep.subr.bf16.mxu0 0
    %296 = vmatpush2.bf16.msra.mxu0 0
    %297 = vmatprep.subr.bf16.mxu0 0
    %298 = vmatpush2.bf16.msra.mxu0 0
    %299 = vmatprep.subr.bf16.mxu0 0
    %300 = vmatpush2.bf16.msra.mxu0 0
    %301 = vmatprep.subr.bf16.mxu0 0
    %302 = vmatpush2.bf16.msra.mxu0 0
    %303 = vmatprep.subr.bf16.mxu0 0
    %304 = vmatpush2.bf16.msra.mxu0 0
    %305 = vmatprep.mubr.bf16.mxu0 0
    %306 = vmatmul.mubr.bf16.gmra.mxu0 %v183
    %v307 = vpop.f32.mrf.mxu0
    %v308 = vadd.f32 0.0, %v307
    %v309 = vpop.f32.mrf.mxu0
    %v310 = vpop.f32.mrf.mxu0
    %v311 = vadd.f32 0.0, %v310
    %v312 = vpop.f32.mrf.mxu0
    %313 = vmatprep.mubr.bf16.mxu0 0
    %314 = vmatmul.mubr.bf16.gmra.mxu0 %v186
    %v315 = vpop.f32.mrf.mxu0
    %v316 = vadd.f32 0.0, %v315
    %v317 = vpop.f32.mrf.mxu0
    %v318 = vpop.f32.mrf.mxu0
    %v319 = vadd.f32 0.0, %v318
    %v320 = vpop.f32.mrf.mxu0
    %321 = vdwg.mxu0
    %v322 = vadd.f32 %v237, %v308
    %v323 = vadd.f32 %v238, %v311
    %v324 = vadd.f32 %v239, %v316
    %v325 = vadd.f32 %v240, %v319
    %v326 = vpack.c.bf16 %v323, %v322
    %v327 = vpack.c.bf16 %v325, %v324
    %v330 = vunpack.c.l.b16 %v326
    %v331 = vunpack.c.h.b16 %v326
    %v332 = vunpack.c.l.b16 %v327
    %v333 = vunpack.c.h.b16 %v327
    %v334 = vpack.c.b16 %v330, %v330
    %v335 = vpack.c.b16 %v331, %v331
    %v336 = vpack.c.b16 %v332, %v332
    %v337 = vpack.c.b16 %v333, %v333
    %vm342 = vcmask 257024
    %343 = vst.msk [vmem:[#allocation2] sm:$0xf] %vm342, %v334
    %344 = vst.msk [vmem:[#allocation2 + $0x4] sm:$0xf] %vm342, %v335
    %345 = vst.msk [vmem:[#allocation2 + $0x8] sm:$0xf] %vm342, %v336
    %346 = vst.msk [vmem:[#allocation2 + $0xc] sm:$0xf] %vm342, %v337
    // Predicated region
    $region26: #{tpu_custom_call.1} parent=1 // pred_check
      _
    $region27: #{tpu_custom_call.1} parent=1 // pred_check_branch
      %348 = sbr.rel (0) target = $region29
    $region28: #{tpu_custom_call.1} parent=1 // pred_region
      %s350 = ssub.s32 256, 256
      %351 = vsyncadd [#allocation3], %s350
      %s352 = sshll.u32 [#allocation2], 4
      %s353 = int_to_ptr.vmem [resolvable:$true] %s352
      %358 = dma.vmem_to_hbm [thread:$0]  %s353, 256, %s6, [#allocation3], 64, 64, 4
    $region29: #{tpu_custom_call.1} parent=1 // pred_fallthru
      _
    // Predicated region
    $region30: #{tpu_custom_call.1} parent=1 // pred_check
      _
    $region31: #{tpu_custom_call.1} parent=1 // pred_check_branch
      %360 = sbr.rel (0) target = $region33
    $region32: #{tpu_custom_call.1} parent=1 // pred_region
      %361 = dma.done [#allocation3], 256
    $region33: #{tpu_custom_call.1} parent=1 // pred_fallthru
      _
    %362 = vsyncpa [#allocation3], 1

</llo_original>
